<compile_context>
chip_gen: v7x
topology: tpu7x:2x2x1
jax: 0.10.0
libtpu: 0.0.40
codegen_flags: <defaults>
</compile_context>

<pallas_src>
import jax
import jax.numpy as jnp
from jax.experimental import pallas as pl
from jax.experimental.pallas import tpu as pltpu

_MiB = 1024 * 1024


def _round_up(x, m):
    return (x + m - 1) // m * m


def _cdiv(a, b):
    return (a + b - 1) // b


def _tpu_generation():
    try:
        kind = jax.devices()[0].device_kind.lower()
    except Exception:
        return "default"
    if "v5 lite" in kind or "v5lite" in kind or "v5e" in kind:
        return "v5e"
    if "v6" in kind:
        return "v6e"
    if "v7" in kind:
        return "v7x"
    if "v4" in kind:
        return "v4"
    return "default"


# Per-generation row-tile / ff-tile targets and scoped-VMEM limits (bytes).
_GEN_CONFIG = {
    # v5e: lowest HBM BW -> amortize weight traffic; TM=256 already balanced.
    "v5e": dict(tm=256, tf=1024, vmem=100 * _MiB),
    # v6e: 128 MiB VMEM, needs fat row tiles to become compute-bound.
    "v6e": dict(tm=768, tf=1024, vmem=104 * _MiB),
    # v7x: 64 MiB physical VMEM per TC -> leave headroom; 3.2 TB/s HBM means
    # TM~384-512 already reaches the compute roofline.
    "v7x": dict(tm=512, tf=512, vmem=56 * _MiB),
    "v4": dict(tm=512, tf=512, vmem=96 * _MiB),
    "default": dict(tm=512, tf=512, vmem=64 * _MiB),
}


# ---------------------------------------------------------------------------
# Kernels
# ---------------------------------------------------------------------------
def _ffn_kernel_resident(x_ref, w_up_ref, b_up_ref, w_down_ref, b_down_ref,
                         o_ref):
    # x_ref: (TM, H); w_up_ref: (H, F); b_up_ref: (1, F)
    # w_down_ref: (F, H); b_down_ref: (1, H); o_ref: (TM, H)
    h = jnp.dot(x_ref[...], w_up_ref[...], preferred_element_type=jnp.float32)
    h = jnp.maximum(h + b_up_ref[...], 0.0)
    out = jnp.dot(h.astype(w_down_ref.dtype), w_down_ref[...],
                  preferred_element_type=jnp.float32)
    o_ref[...] = (out + b_down_ref[...]).astype(o_ref.dtype)


def _ffn_kernel_reduce(x_ref, w_up_ref, b_up_ref, w_down_ref, b_down_ref,
                       o_ref, acc_ref):
    # x_ref: (TM, H); w_up_ref: (H, TF); b_up_ref: (1, TF)
    # w_down_ref: (TF, H); b_down_ref: (1, H); o_ref: (TM, H); acc f32 scratch.
    f = pl.program_id(1)

    @pl.when(f == 0)
    def _():
        acc_ref[...] = jnp.zeros_like(acc_ref)

    h = jnp.dot(x_ref[...], w_up_ref[...], preferred_element_type=jnp.float32)
    h = jnp.maximum(h + b_up_ref[...], 0.0)
    acc_ref[...] += jnp.dot(h.astype(w_down_ref.dtype), w_down_ref[...],
                            preferred_element_type=jnp.float32)

    @pl.when(f == pl.num_programs(1) - 1)
    def _():
        # b_down added exactly once, at finalize.
        o_ref[...] = (acc_ref[...] + b_down_ref[...]).astype(o_ref.dtype)


# ---------------------------------------------------------------------------
# Wrapper
# ---------------------------------------------------------------------------
def feed_forward(x, w_up, b_up, w_down, b_down, *, use_bf16_compute=False):
    """x: (..., hidden). w_up: (hidden, d_ff), b_up: (d_ff,),
    w_down: (d_ff, hidden), b_down: (hidden,). Returns same shape/dtype as x.

    use_bf16_compute=True casts x/W to bf16 for the MXU (f32 accumulation);
    this is a numerics tradeoff and is off by default."""
    orig_shape = x.shape
    hidden = orig_shape[-1]
    d_ff = w_up.shape[1]
    out_dtype = x.dtype

    x2d = x.reshape(-1, hidden)
    M = x2d.shape[0]

    if use_bf16_compute:
        x2d = x2d.astype(jnp.bfloat16)
        w_up = w_up.astype(jnp.bfloat16)
        w_down = w_down.astype(jnp.bfloat16)

    xbytes = jnp.dtype(x2d.dtype).itemsize
    wbytes = jnp.dtype(w_up.dtype).itemsize
    obytes = jnp.dtype(out_dtype).itemsize

    gen = _tpu_generation()
    cfg = _GEN_CONFIG.get(gen, _GEN_CONFIG["default"])
    tm_target, tf_target, vmem_limit = cfg["tm"], cfg["tf"], cfg["vmem"]
    budget = int(vmem_limit * 0.85)  # headroom for compiler internal scratch

    # Sublane multiple (second-minor dim) for the activation dtype.
    sub = {4: 8, 2: 16, 1: 32}.get(xbytes, 8)

    # ---- Row tile selection: avoid M_pad blow-up on awkward M --------------
    n_tiles = max(1, _cdiv(M, tm_target))
    if gen == "v7x" and n_tiles == 1 and M >= 2 * sub:
        n_tiles = 2  # keep both TensorCores busy on the parallel axis
    TM = _round_up(_cdiv(M, n_tiles), sub)

    # ---- VMEM footprint models (double-buffered inputs/outputs) ------------
    def _resident_bytes(tm):
        return (2 * tm * hidden * xbytes            # x tile
                + 2 * hidden * d_ff * wbytes        # w_up
                + 2 * d_ff * hidden * wbytes        # w_down
                + 2 * (d_ff + hidden) * wbytes      # biases
                + 2 * tm * hidden * obytes)         # out tile

    def _reduce_bytes(tm, tf):
        return (2 * tm * hidden * xbytes
                + 2 * hidden * tf * wbytes
                + 2 * tf * hidden * wbytes
                + 2 * (tf + hidden) * wbytes
                + 2 * tm * hidden * obytes
                + tm * hidden * 4)                  # f32 accumulator scratch

    resident = _resident_bytes(TM) <= budget

    if resident:
        TF = d_ff
        F_pad = d_ff
    else:
        TF = tf_target if d_ff > tf_target else d_ff
        # Shrink TF (keeping it a multiple of 128), then TM, to fit VMEM.
        while _reduce_bytes(TM, TF) > budget and TF > 512 and TF % 256 == 0:
            TF //= 2
        while _reduce_bytes(TM, TF) > budget and TM > sub:
            TM = _round_up(max(TM // 2, sub), sub)
        F_pad = _round_up(d_ff, TF)

    M_pad = _round_up(M, TM)
    grid_i = M_pad // TM

    # ---- Zero-padding (exact: relu(0)*0 contributes 0) ----------------------
    if M_pad != M:
        x2d = jnp.pad(x2d, ((0, M_pad - M), (0, 0)))
    if F_pad != d_ff:
        w_up = jnp.pad(w_up, ((0, 0), (0, F_pad - d_ff)))
        b_up = jnp.pad(b_up, ((0, F_pad - d_ff),))
        w_down = jnp.pad(w_down, ((0, F_pad - d_ff), (0, 0)))

    # ---- Advisory cost estimate (reflects weight residency) -----------------
    weight_bytes_once = (2 * hidden * F_pad + F_pad + hidden) * wbytes
    wt_mult = 1 if resident else grid_i
    cost = pl.CostEstimate(
        flops=4 * M_pad * hidden * F_pad,  # two matmuls, 2*M*H*F flops each
        transcendentals=0,
        bytes_accessed=(M_pad * hidden * (xbytes + obytes)
                        + wt_mult * weight_bytes_once),
    )

    b_up_2d = b_up.reshape(1, F_pad)
    b_down_2d = b_down.reshape(1, hidden)

    if resident:
        out = pl.pallas_call(
            _ffn_kernel_resident,
            out_shape=jax.ShapeDtypeStruct((M_pad, hidden), out_dtype),
            grid_spec=pltpu.PrefetchScalarGridSpec(
                num_scalar_prefetch=0,
                grid=(grid_i,),
                in_specs=[
                    pl.BlockSpec((TM, hidden), lambda i: (i, 0)),
                    # Constant block index -> weights fetched once, reused by
                    # every row tile.
                    pl.BlockSpec((hidden, F_pad), lambda i: (0, 0)),
                    pl.BlockSpec((1, F_pad), lambda i: (0, 0)),
                    pl.BlockSpec((F_pad, hidden), lambda i: (0, 0)),
                    pl.BlockSpec((1, hidden), lambda i: (0, 0)),
                ],
                out_specs=pl.BlockSpec((TM, hidden), lambda i: (i, 0)),
            ),
            compiler_params=pltpu.CompilerParams(
                dimension_semantics=("parallel",),
                vmem_limit_bytes=vmem_limit,
            ),
            cost_estimate=cost,
        )(x2d, w_up, b_up_2d, w_down, b_down_2d)
    else:
        out = pl.pallas_call(
            _ffn_kernel_reduce,
            out_shape=jax.ShapeDtypeStruct((M_pad, hidden), out_dtype),
            grid_spec=pltpu.PrefetchScalarGridSpec(
                num_scalar_prefetch=0,
                grid=(grid_i, F_pad // TF),
                in_specs=[
                    # Activations stream over i, resident across the F loop.
                    pl.BlockSpec((TM, hidden), lambda i, f: (i, 0)),
                    # Weight slabs stream over f.
                    pl.BlockSpec((hidden, TF), lambda i, f: (0, f)),
                    pl.BlockSpec((1, TF), lambda i, f: (0, f)),
                    pl.BlockSpec((TF, hidden), lambda i, f: (f, 0)),
                    pl.BlockSpec((1, hidden), lambda i, f: (0, 0)),
                ],
                # Lane-dense output tile (last dim == hidden), same block
                # across f, written only on the last reduction step.
                out_specs=pl.BlockSpec((TM, hidden), lambda i, f: (i, 0)),
                scratch_shapes=[pltpu.VMEM((TM, hidden), jnp.float32)],
            ),
            compiler_params=pltpu.CompilerParams(
                dimension_semantics=("parallel", "arbitrary"),
                vmem_limit_bytes=vmem_limit,
            ),
            cost_estimate=cost,
        )(x2d, w_up, b_up_2d, w_down, b_down_2d)

    if M_pad != M:
        out = out[:M]
    return out.reshape(orig_shape)


# ---------------------------------------------------------------------------
# Init / reference / test
# ---------------------------------------------------------------------------
def init_params(key, hidden_dim, d_ff, dtype=jnp.float32):
    """Deterministic init mimicking nn.Linear default (uniform +-1/sqrt(fan_in)).
    Weights returned already transposed to (in_features, out_features)."""
    k1, k2, k3, k4 = jax.random.split(key, 4)
    bound_up = 1.0 / (hidden_dim ** 0.5)
    bound_down = 1.0 / (d_ff ** 0.5)
    w_up = jax.random.uniform(k1, (hidden_dim, d_ff), dtype,
                              minval=-bound_up, maxval=bound_up)
    b_up = jax.random.uniform(k2, (d_ff,), dtype,
                              minval=-bound_up, maxval=bound_up)
    w_down = jax.random.uniform(k3, (d_ff, hidden_dim), dtype,
                                minval=-bound_down, maxval=bound_down)
    b_down = jax.random.uniform(k4, (hidden_dim,), dtype,
                                minval=-bound_down, maxval=bound_down)
    return w_up, b_up, w_down, b_down


def _reference(x, w_up, b_up, w_down, b_down):
    return jnp.maximum(x @ w_up + b_up, 0.0) @ w_down + b_down


if __name__ == "__main__":
    key = jax.random.PRNGKey(0)

    # --- Small shapes consistent with the module (batch=2, seq=8, hidden=32) -
    batch, seq, hidden_dim, d_ff = 2, 8, 32, 64
    kx, kp, kx2, kp2 = jax.random.split(key, 4)
    x = jax.random.normal(kx, (batch, seq, hidden_dim), jnp.float32)
    w_up, b_up, w_down, b_down = init_params(kp, hidden_dim, d_ff)

    out = jax.block_until_ready(feed_forward(x, w_up, b_up, w_down, b_down))
    ref = _reference(x, w_up, b_up, w_down, b_down)
    assert out.shape == x.shape
    assert jnp.allclose(out, ref, atol=1e-5, rtol=1e-5)

    # --- Larger case to exercise M padding and (possibly) F tiling ----------
    b2, s2, h2, f2 = 2, 20, 128, 1024
    x2 = jax.random.normal(kx2, (b2, s2, h2), jnp.float32)
    w_up2, b_up2, w_down2, b_down2 = init_params(kp2, h2, f2)
    out2 = jax.block_until_ready(
        feed_forward(x2, w_up2, b_up2, w_down2, b_down2))
    ref2 = _reference(x2, w_up2, b_up2, w_down2, b_down2)
    assert out2.shape == x2.shape
    assert jnp.allclose(out2, ref2, atol=1e-4, rtol=1e-4)

    print("KERNEL_OK")
</pallas_src>

<mosaic_0001>
module attributes {stable_mosaic.version = 11 : i64} {
  func.func @_ffn_kernel_resident(%arg0: i32, %arg1: memref<16x32xf32, #tpu.memory_space<vmem>>, %arg2: memref<32x64xf32, #tpu.memory_space<vmem>>, %arg3: memref<1x64xf32, #tpu.memory_space<vmem>>, %arg4: memref<64x32xf32, #tpu.memory_space<vmem>>, %arg5: memref<1x32xf32, #tpu.memory_space<vmem>>, %arg6: memref<16x32xf32, #tpu.memory_space<vmem>>) attributes {dimension_semantics = [#tpu.dimension_semantics<parallel>], iteration_bounds = array<i64: 1>, scalar_prefetch = 0 : i64, scratch_operands = 0 : i64, tpu.core_type = #tpu.core_type<tc>, window_params = [{transform_indices = @transform_0, window_bounds = array<i64: 16, 32>}, {pipeline_mode = #tpu.pipeline_mode<synchronous>, transform_indices = @transform_1, window_bounds = array<i64: 32, 64>}, {pipeline_mode = #tpu.pipeline_mode<synchronous>, transform_indices = @transform_2, window_bounds = array<i64: 1, 64>}, {pipeline_mode = #tpu.pipeline_mode<synchronous>, transform_indices = @transform_3, window_bounds = array<i64: 64, 32>}, {pipeline_mode = #tpu.pipeline_mode<synchronous>, transform_indices = @transform_4, window_bounds = array<i64: 1, 32>}, {transform_indices = @transform_5, window_bounds = array<i64: 16, 32>}]} {
    %c0 = arith.constant 0 : index
    %c0_0 = arith.constant 0 : index
    %0 = vector.load %arg1[%c0, %c0_0] : memref<16x32xf32, #tpu.memory_space<vmem>>, vector<16x32xf32>
    %c0_1 = arith.constant 0 : index
    %c0_2 = arith.constant 0 : index
    %1 = vector.load %arg2[%c0_1, %c0_2] : memref<32x64xf32, #tpu.memory_space<vmem>>, vector<32x64xf32>
    %cst = arith.constant dense<0.000000e+00> : vector<16x64xf32>
    %2 = tpu.matmul %0, %1, %cst {dimension_numbers = #tpu.dot_dimension_numbers<[1], [0], [0], [1], [0, 0, 1, 1], [], []>} : vector<16x32xf32>, vector<32x64xf32>, vector<16x64xf32> -> vector<16x64xf32>
    %c0_3 = arith.constant 0 : index
    %c0_4 = arith.constant 0 : index
    %3 = vector.load %arg3[%c0_3, %c0_4] : memref<1x64xf32, #tpu.memory_space<vmem>>, vector<1x64xf32>
    %4 = vector.broadcast %3 : vector<1x64xf32> to vector<16x64xf32>
    %5 = arith.addf %2, %4 : vector<16x64xf32>
    %cst_5 = arith.constant 0.000000e+00 : f32
    %6 = vector.broadcast %cst_5 : f32 to vector<16x64xf32>
    %7 = arith.maximumf %5, %6 : vector<16x64xf32>
    %c0_6 = arith.constant 0 : index
    %c0_7 = arith.constant 0 : index
    %8 = vector.load %arg4[%c0_6, %c0_7] : memref<64x32xf32, #tpu.memory_space<vmem>>, vector<64x32xf32>
    %cst_8 = arith.constant dense<0.000000e+00> : vector<16x32xf32>
    %9 = tpu.matmul %7, %8, %cst_8 {dimension_numbers = #tpu.dot_dimension_numbers<[1], [0], [0], [1], [0, 0, 1, 1], [], []>} : vector<16x64xf32>, vector<64x32xf32>, vector<16x32xf32> -> vector<16x32xf32>
    %c0_9 = arith.constant 0 : index
    %c0_10 = arith.constant 0 : index
    %10 = vector.load %arg5[%c0_9, %c0_10] : memref<1x32xf32, #tpu.memory_space<vmem>>, vector<1x32xf32>
    %11 = vector.broadcast %10 : vector<1x32xf32> to vector<16x32xf32>
    %12 = arith.addf %9, %11 : vector<16x32xf32>
    %c0_11 = arith.constant 0 : index
    %c0_12 = arith.constant 0 : index
    %13 = vector.load %arg6[%c0_11, %c0_12] : memref<16x32xf32, #tpu.memory_space<vmem>>, vector<16x32xf32>
    tpu.vector_store %arg6[%c0_11, %c0_12], %12 {strides = array<i32>} : memref<16x32xf32, #tpu.memory_space<vmem>>, vector<16x32xf32>,
    return
  }
  func.func @transform_0(%arg0: i32) -> (i32, i32) {
    %c0_i32 = arith.constant 0 : i32
    %c0_i32_0 = arith.constant 0 : i32
    return %arg0, %c0_i32 : i32, i32
  }
  func.func @transform_1(%arg0: i32) -> (i32, i32) {
    %c0_i32 = arith.constant 0 : i32
    %c0_i32_0 = arith.constant 0 : i32
    %c0_i32_1 = arith.constant 0 : i32
    return %c0_i32, %c0_i32_0 : i32, i32
  }
  func.func @transform_2(%arg0: i32) -> (i32, i32) {
    %c0_i32 = arith.constant 0 : i32
    %c0_i32_0 = arith.constant 0 : i32
    %c0_i32_1 = arith.constant 0 : i32
    return %c0_i32, %c0_i32_0 : i32, i32
  }
  func.func @transform_3(%arg0: i32) -> (i32, i32) {
    %c0_i32 = arith.constant 0 : i32
    %c0_i32_0 = arith.constant 0 : i32
    %c0_i32_1 = arith.constant 0 : i32
    return %c0_i32, %c0_i32_0 : i32, i32
  }
  func.func @transform_4(%arg0: i32) -> (i32, i32) {
    %c0_i32 = arith.constant 0 : i32
    %c0_i32_0 = arith.constant 0 : i32
    %c0_i32_1 = arith.constant 0 : i32
    return %c0_i32, %c0_i32_0 : i32, i32
  }
  func.func @transform_5(%arg0: i32) -> (i32, i32) {
    %c0_i32 = arith.constant 0 : i32
    %c0_i32_0 = arith.constant 0 : i32
    return %arg0, %c0_i32 : i32, i32
  }
}

</mosaic_0001>

<llo_original>
// kernel: tpu_custom_call.1
$region0: #{tpu_custom_call.1}
  #allocation0 [shape = 'u32[]', space=smem, size = 0x4, offset = 0x4, fixed_abs, tag = 'smem constant byte address 0x4 - core index']
  #allocation1 [shape = 'u32[144,128]{1,0:T(1,128)}', space=vmem, size = 0x12000, scoped, tag = 'internal scratch']
  %s0 = inlined_call_operand.hbm [shape: f32[16,32], index: 0, kind: input, shape index: {}]
  %s1 = inlined_call_operand.hbm [shape: f32[32,64], index: 1, kind: input, shape index: {}]
  %s2 = inlined_call_operand.hbm [shape: f32[1,64], index: 2, kind: input, shape index: {}]
  %s3 = inlined_call_operand.hbm [shape: f32[64,32], index: 3, kind: input, shape index: {}]
  %s4 = inlined_call_operand.hbm [shape: f32[1,32], index: 4, kind: input, shape index: {}]
  %s5 = inlined_call_operand.hbm [shape: f32[16,32], index: 5, kind: output, shape index: {}]
  %s6 = sld [smem:[#allocation0]]
  $region50: #{tpu_custom_call.1} parent=0
    _
  %s8 = ssub.s32 1, %s6
  %s9 = scalar_select 0, %s8, %s6
  $region1: #{tpu_custom_call.1} parent=0
    #allocation2 [shape = 'u8[8192]{0}', space=vmem, size = 0x2000, scoped, tag = 'input window, operand 0, single buffered']
    #allocation3 [shape = 's32[1]{0}', space=sflag, size = 0x4, scoped, tag = 'scoped memory for tpu_custom_call.1']
    #allocation4 [shape = 's32[1]{0}', space=sflag, size = 0x4, scoped, tag = 'scoped memory for tpu_custom_call.1']
    #allocation5 [shape = 'u8[16384]{0}', space=vmem, size = 0x4000, scoped, tag = 'input window, operand 1, single buffered']
    #allocation6 [shape = 's32[1]{0}', space=sflag, size = 0x4, scoped, tag = 'scoped memory for tpu_custom_call.1']
    #allocation7 [shape = 'u8[512]{0}', space=vmem, size = 0x400, scoped, tag = 'input window, operand 2, single buffered']
    #allocation8 [shape = 'u8[32768]{0}', space=vmem, size = 0x8000, scoped, tag = 'input window, operand 3, single buffered']
    #allocation9 [shape = 's32[1]{0}', space=sflag, size = 0x4, scoped, tag = 'scoped memory for tpu_custom_call.1']
    #allocation10 [shape = 'u8[512]{0}', space=vmem, size = 0x400, scoped, tag = 'input window, operand 4, single buffered']
    #allocation11 [shape = 'u8[8192]{0}', space=vmem, size = 0x2000, scoped, tag = 'output window, operand 0, single buffered']
    %10 = vsyncpa [#allocation3], 0
    %11 = vsyncpa [#allocation6], 0
    %12 = vsyncpa [#allocation9], 0
    %13 = vsyncpa [#allocation4], 0
    // Predicated region
    $region2: #{tpu_custom_call.1} parent=1 // pred_check
      _
    $region3: #{tpu_custom_call.1} parent=1 // pred_check_branch
      %15 = sbr.rel (0) target = $region5
    $region4: #{tpu_custom_call.1} parent=1 // pred_region
      %s17 = ssub.s32 256, 256
      %18 = vsyncadd [#allocation3], %s17
      %s19 = sshll.u32 [#allocation2], 4
      %s20 = int_to_ptr.vmem [resolvable:$true] %s19
      %25 = dma.hbm_to_vmem [thread:$0]  %s0, 256, %s20, [#allocation3], 128, 128, 8
    $region5: #{tpu_custom_call.1} parent=1 // pred_fallthru
      _
    // Predicated region
    $region6: #{tpu_custom_call.1} parent=1 // pred_check
      _
    $region7: #{tpu_custom_call.1} parent=1 // pred_check_branch
      %27 = sbr.rel (0) target = $region9
    $region8: #{tpu_custom_call.1} parent=1 // pred_region
      %s29 = ssub.s32 512, 512
      %30 = vsyncadd [#allocation6], %s29
      %s31 = sshll.u32 [#allocation5], 4
      %s32 = int_to_ptr.vmem [resolvable:$true] %s31
      %37 = dma.hbm_to_vmem [thread:$0]  %s1, 512, %s32, [#allocation6], 128, 128, 8
    $region9: #{tpu_custom_call.1} parent=1 // pred_fallthru
      _
    // Predicated region
    $region10: #{tpu_custom_call.1} parent=1 // pred_check
      _
    $region11: #{tpu_custom_call.1} parent=1 // pred_check_branch
      %39 = sbr.rel (0) target = $region13
    $region12: #{tpu_custom_call.1} parent=1 // pred_region
      %s41 = ssub.s32 16, 16
      %42 = vsyncadd [#allocation6], %s41
      %s44 = sshll.u32 [#allocation7], 4
      %s45 = int_to_ptr.vmem [resolvable:$true] %s44
      %47 = dma.hbm_to_vmem [thread:$0]  %s2, 16, %s45, [#allocation6]
    $region13: #{tpu_custom_call.1} parent=1 // pred_fallthru
      _
    // Predicated region
    $region14: #{tpu_custom_call.1} parent=1 // pred_check
      _
    $region15: #{tpu_custom_call.1} parent=1 // pred_check_branch
      %49 = sbr.rel (0) target = $region17
    $region16: #{tpu_custom_call.1} parent=1 // pred_region
      %s51 = ssub.s32 1024, 1024
      %52 = vsyncadd [#allocation9], %s51
      %s53 = sshll.u32 [#allocation8], 4
      %s54 = int_to_ptr.vmem [resolvable:$true] %s53
      %59 = dma.hbm_to_vmem [thread:$0]  %s3, 1024, %s54, [#allocation9], 128, 128, 8
    $region17: #{tpu_custom_call.1} parent=1 // pred_fallthru
      _
    // Predicated region
    $region18: #{tpu_custom_call.1} parent=1 // pred_check
      _
    $region19: #{tpu_custom_call.1} parent=1 // pred_check_branch
      %61 = sbr.rel (0) target = $region21
    $region20: #{tpu_custom_call.1} parent=1 // pred_region
      %s63 = ssub.s32 16, 16
      %64 = vsyncadd [#allocation9], %s63
      %s66 = sshll.u32 [#allocation10], 4
      %s67 = int_to_ptr.vmem [resolvable:$true] %s66
      %69 = dma.hbm_to_vmem [thread:$0]  %s4, 16, %s67, [#allocation9]
    $region21: #{tpu_custom_call.1} parent=1 // pred_fallthru
      _
    // Predicated region
    $region22: #{tpu_custom_call.1} parent=1 // pred_check
      _
    $region23: #{tpu_custom_call.1} parent=1 // pred_check_branch
      %71 = sbr.rel (0) target = $region25
    $region24: #{tpu_custom_call.1} parent=1 // pred_region
      %72 = dma.done [#allocation3], 256
    $region25: #{tpu_custom_call.1} parent=1 // pred_fallthru
      _
    // Predicated region
    $region26: #{tpu_custom_call.1} parent=1 // pred_check
      _
    $region27: #{tpu_custom_call.1} parent=1 // pred_check_branch
      %74 = sbr.rel (0) target = $region29
    $region28: #{tpu_custom_call.1} parent=1 // pred_region
      %75 = dma.done [#allocation6], 512
    $region29: #{tpu_custom_call.1} parent=1 // pred_fallthru
      _
    // Predicated region
    $region30: #{tpu_custom_call.1} parent=1 // pred_check
      _
    $region31: #{tpu_custom_call.1} parent=1 // pred_check_branch
      %77 = sbr.rel (0) target = $region33
    $region32: #{tpu_custom_call.1} parent=1 // pred_region
      %78 = dma.done [#allocation6], 16
    $region33: #{tpu_custom_call.1} parent=1 // pred_fallthru
      _
    // Predicated region
    $region34: #{tpu_custom_call.1} parent=1 // pred_check
      _
    $region35: #{tpu_custom_call.1} parent=1 // pred_check_branch
      %80 = sbr.rel (0) target = $region37
    $region36: #{tpu_custom_call.1} parent=1 // pred_region
      %81 = dma.done [#allocation9], 1024
    $region37: #{tpu_custom_call.1} parent=1 // pred_fallthru
      _
    // Predicated region
    $region38: #{tpu_custom_call.1} parent=1 // pred_check
      _
    $region39: #{tpu_custom_call.1} parent=1 // pred_check_branch
      %83 = sbr.rel (0) target = $region41
    $region40: #{tpu_custom_call.1} parent=1 // pred_region
      %84 = dma.done [#allocation9], 16
    $region41: #{tpu_custom_call.1} parent=1 // pred_fallthru
      _
    %v85 = vld [vmem:[#allocation2] sm:$0xff]
    %v86 = vld [vmem:[#allocation2 + $0x8] sm:$0xff]
    %v87 = vld [vmem:[#allocation5] sm:$0xff]
    %v88 = vld [vmem:[#allocation5 + $0x8] sm:$0xff]
    %v89 = vld [vmem:[#allocation5 + $0x10] sm:$0xff]
    %v90 = vld [vmem:[#allocation5 + $0x18] sm:$0xff]
    %v91 = vld [vmem:[#allocation7] sm:$0x1]
    %v93 = vlaneseq
    %v94 = vshrl.u32 %v93, 7
    %v95 = vsub.s32 0, %v94
    %v96 = vrot.slane %v91, %v95
    %vm98 = vcmask 261120
    %v100 = vsel %vm98, %v85, 0
    %v103 = vsel %vm98, %v86, 0
    %105 = vmatprep.subr.mxu0 0.0
    %106 = vmatpush1.msra.mxu0 %v87
    %107 = vmatprep.subr.mxu0 0.0
    %108 = vmatpush1.msra.mxu0 %v88
    %109 = vmatprep.subr.mxu0 0.0
    %110 = vmatpush1.msra.mxu0 %v89
    %111 = vmatprep.subr.mxu0 0.0
    %112 = vmatpush1.msra.mxu0 %v90
    %113 = vmatprep.subr.mxu0 0.0
    %114 = vmatpush1.msra.mxu0 0.0
    %115 = vmatprep.subr.mxu0 0.0
    %116 = vmatpush1.msra.mxu0 0.0
    %117 = vmatprep.subr.mxu0 0.0
    %118 = vmatpush1.msra.mxu0 0.0
    %119 = vmatprep.subr.mxu0 0.0
    %120 = vmatpush1.msra.mxu0 0.0
    %121 = vmatprep.subr.mxu0 0.0
    %122 = vmatpush1.msra.mxu0 0.0
    %123 = vmatprep.subr.mxu0 0.0
    %124 = vmatpush1.msra.mxu0 0.0
    %125 = vmatprep.subr.mxu0 0.0
    %126 = vmatpush1.msra.mxu0 0.0
    %127 = vmatprep.subr.mxu0 0.0
    %128 = vmatpush1.msra.mxu0 0.0
    %129 = vmatprep.subr.mxu0 0.0
    %130 = vmatpush1.msra.mxu0 0.0
    %131 = vmatprep.subr.mxu0 0.0
    %132 = vmatpush1.msra.mxu0 0.0
    %133 = vmatprep.subr.mxu0 0.0
    %134 = vmatpush1.msra.mxu0 0.0
    %135 = vmatprep.subr.mxu0 0.0
    %136 = vmatpush1.msra.mxu0 0.0
    %137 = vmatprep.subr.mxu0 0.0
    %138 = vmatpush1.msra.mxu0 0.0
    %139 = vmatprep.subr.mxu0 0.0
    %140 = vmatpush1.msra.mxu0 0.0
    %141 = vmatprep.subr.mxu0 0.0
    %142 = vmatpush1.msra.mxu0 0.0
    %143 = vmatprep.subr.mxu0 0.0
    %144 = vmatpush1.msra.mxu0 0.0
    %145 = vmatprep.subr.mxu0 0.0
    %146 = vmatpush1.msra.mxu0 0.0
    %147 = vmatprep.subr.mxu0 0.0
    %148 = vmatpush1.msra.mxu0 0.0
    %149 = vmatprep.subr.mxu0 0.0
    %150 = vmatpush1.msra.mxu0 0.0
    %151 = vmatprep.subr.mxu0 0.0
    %152 = vmatpush1.msra.mxu0 0.0
    %153 = vmatprep.subr.mxu0 0.0
    %154 = vmatpush1.msra.mxu0 0.0
    %155 = vmatprep.subr.mxu0 0.0
    %156 = vmatpush1.msra.mxu0 0.0
    %157 = vmatprep.subr.mxu0 0.0
    %158 = vmatpush1.msra.mxu0 0.0
    %159 = vmatprep.subr.mxu0 0.0
    %160 = vmatpush1.msra.mxu0 0.0
    %161 = vmatprep.subr.mxu0 0.0
    %162 = vmatpush1.msra.mxu0 0.0
    %163 = vmatprep.subr.mxu0 0.0
    %164 = vmatpush1.msra.mxu0 0.0
    %165 = vmatprep.subr.mxu0 0.0
    %166 = vmatpush1.msra.mxu0 0.0
    %167 = vmatprep.subr.mxu0 0.0
    %168 = vmatpush1.msra.mxu0 0.0
    %169 = vmatprep.mubr.f32.mxu0 0.0
    %170 = vmatmul.mubr.f32.gmra.mrb[0].mxu0 %v100
    %v171 = vpop.f32.mrb[0].mxu0
    %v172 = vadd.f32 %v96, %v171
    %v173 = vpop.f32.mrb[0].mxu0
    %174 = vmatprep.mubr.f32.mxu0 0.0
    %175 = vmatmul.mubr.f32.gmra.mrb[0].mxu0 %v103
    %v176 = vpop.f32.mrb[0].mxu0
    %v177 = vadd.f32 %v96, %v176
    %v178 = vpop.f32.mrb[0].mxu0
    %179 = vdwg.mxu0
    %v180 = vmax.f32 %v172, 0.0
    %v181 = vmax.f32 %v177, 0.0
    %v182 = vld [vmem:[#allocation8] sm:$0xff]
    %v183 = vld [vmem:[#allocation8 + $0x8] sm:$0xff]
    %v184 = vld [vmem:[#allocation8 + $0x10] sm:$0xff]
    %v185 = vld [vmem:[#allocation8 + $0x18] sm:$0xff]
    %v186 = vld [vmem:[#allocation8 + $0x20] sm:$0xff]
    %v187 = vld [vmem:[#allocation8 + $0x28] sm:$0xff]
    %v188 = vld [vmem:[#allocation8 + $0x30] sm:$0xff]
    %v189 = vld [vmem:[#allocation8 + $0x38] sm:$0xff]
    %v190 = vld [vmem:[#allocation10] sm:$0x1]
    %v192 = vlaneseq
    %v193 = vshrl.u32 %v192, 7
    %v194 = vsub.s32 0, %v193
    %v195 = vrot.slane %v190, %v194
    %vm197 = vcmask 523264
    %v199 = vsel %vm197, %v180, 0
    %v202 = vsel %vm197, %v181, 0
    %204 = vmatprep.subr.mxu0 0.0
    %205 = vmatpush1.msra.mxu0 %v182
    %206 = vmatprep.subr.mxu0 0.0
    %207 = vmatpush1.msra.mxu0 %v183
    %208 = vmatprep.subr.mxu0 0.0
    %209 = vmatpush1.msra.mxu0 %v184
    %210 = vmatprep.subr.mxu0 0.0
    %211 = vmatpush1.msra.mxu0 %v185
    %212 = vmatprep.subr.mxu0 0.0
    %213 = vmatpush1.msra.mxu0 %v186
    %214 = vmatprep.subr.mxu0 0.0
    %215 = vmatpush1.msra.mxu0 %v187
    %216 = vmatprep.subr.mxu0 0.0
    %217 = vmatpush1.msra.mxu0 %v188
    %218 = vmatprep.subr.mxu0 0.0
    %219 = vmatpush1.msra.mxu0 %v189
    %220 = vmatprep.subr.mxu0 0.0
    %221 = vmatpush1.msra.mxu0 0.0
    %222 = vmatprep.subr.mxu0 0.0
    %223 = vmatpush1.msra.mxu0 0.0
    %224 = vmatprep.subr.mxu0 0.0
    %225 = vmatpush1.msra.mxu0 0.0
    %226 = vmatprep.subr.mxu0 0.0
    %227 = vmatpush1.msra.mxu0 0.0
    %228 = vmatprep.subr.mxu0 0.0
    %229 = vmatpush1.msra.mxu0 0.0
    %230 = vmatprep.subr.mxu0 0.0
    %231 = vmatpush1.msra.mxu0 0.0
    %232 = vmatprep.subr.mxu0 0.0
    %233 = vmatpush1.msra.mxu0 0.0
    %234 = vmatprep.subr.mxu0 0.0
    %235 = vmatpush1.msra.mxu0 0.0
    %236 = vmatprep.subr.mxu0 0.0
    %237 = vmatpush1.msra.mxu0 0.0
    %238 = vmatprep.subr.mxu0 0.0
    %239 = vmatpush1.msra.mxu0 0.0
    %240 = vmatprep.subr.mxu0 0.0
    %241 = vmatpush1.msra.mxu0 0.0
    %242 = vmatprep.subr.mxu0 0.0
    %243 = vmatpush1.msra.mxu0 0.0
    %244 = vmatprep.subr.mxu0 0.0
    %245 = vmatpush1.msra.mxu0 0.0
    %246 = vmatprep.subr.mxu0 0.0
    %247 = vmatpush1.msra.mxu0 0.0
    %248 = vmatprep.subr.mxu0 0.0
    %249 = vmatpush1.msra.mxu0 0.0
    %250 = vmatprep.subr.mxu0 0.0
    %251 = vmatpush1.msra.mxu0 0.0
    %252 = vmatprep.subr.mxu0 0.0
    %253 = vmatpush1.msra.mxu0 0.0
    %254 = vmatprep.subr.mxu0 0.0
    %255 = vmatpush1.msra.mxu0 0.0
    %256 = vmatprep.subr.mxu0 0.0
    %257 = vmatpush1.msra.mxu0 0.0
    %258 = vmatprep.subr.mxu0 0.0
    %259 = vmatpush1.msra.mxu0 0.0
    %260 = vmatprep.subr.mxu0 0.0
    %261 = vmatpush1.msra.mxu0 0.0
    %262 = vmatprep.subr.mxu0 0.0
    %263 = vmatpush1.msra.mxu0 0.0
    %264 = vmatprep.subr.mxu0 0.0
    %265 = vmatpush1.msra.mxu0 0.0
    %266 = vmatprep.subr.mxu0 0.0
    %267 = vmatpush1.msra.mxu0 0.0
    %268 = vmatprep.mubr.f32.mxu0 0.0
    %269 = vmatmul.mubr.f32.gmra.mrb[0].mxu0 %v199
    %v270 = vpop.f32.mrb[0].mxu0
    %v271 = vadd.f32 %v195, %v270
    %v272 = vpop.f32.mrb[0].mxu0
    %273 = vmatprep.mubr.f32.mxu0 0.0
    %274 = vmatmul.mubr.f32.gmra.mrb[0].mxu0 %v202
    %v275 = vpop.f32.mrb[0].mxu0
    %v276 = vadd.f32 %v195, %v275
    %v277 = vpop.f32.mrb[0].mxu0
    %278 = vdwg.mxu0
    %279 = vst.msk [vmem:[#allocation11] sm:$0xff] %vm98, %v271
    %280 = vst.msk [vmem:[#allocation11 + $0x8] sm:$0xff] %vm98, %v276
    // Predicated region
    $region42: #{tpu_custom_call.1} parent=1 // pred_check
      _
    $region43: #{tpu_custom_call.1} parent=1 // pred_check_branch
      %282 = sbr.rel (0) target = $region45
    $region44: #{tpu_custom_call.1} parent=1 // pred_region
      %s284 = ssub.s32 256, 256
      %285 = vsyncadd [#allocation4], %s284
      %s286 = sshll.u32 [#allocation11], 4
      %s287 = int_to_ptr.vmem [resolvable:$true] %s286
      %292 = dma.vmem_to_hbm [thread:$0]  %s287, 256, %s5, [#allocation4], 128, 128, 8
    $region45: #{tpu_custom_call.1} parent=1 // pred_fallthru
      _
    // Predicated region
    $region46: #{tpu_custom_call.1} parent=1 // pred_check
      _
    $region47: #{tpu_custom_call.1} parent=1 // pred_check_branch
      %294 = sbr.rel (0) target = $region49
    $region48: #{tpu_custom_call.1} parent=1 // pred_region
      %295 = dma.done [#allocation4], 256
    $region49: #{tpu_custom_call.1} parent=1 // pred_fallthru
      _
    %296 = vsyncpa [#allocation3], 1
    %297 = vsyncpa [#allocation6], 1
    %298 = vsyncpa [#allocation9], 1
    %299 = vsyncpa [#allocation4], 1

</llo_original>
